<compile_context>
chip_gen: v6e
topology: v6e:2x2x1
jax: 0.10.0
libtpu: 0.0.40
codegen_flags: <defaults>
</compile_context>

<pallas_src>
import functools

import jax
import jax.numpy as jnp
from jax.experimental import pallas as pl
from jax.experimental.pallas import tpu as pltpu

LN_EPS = 1e-5
LANE = 128


def _round_up(a, b):
    return (a + b - 1) // b * b


# ----------------------------------------------------------------------------
# Fused GCAB kernel.  Grid = (N, 2, n_hw_tiles); axis 1: 0 = pool, 1 = apply.
# ----------------------------------------------------------------------------
def _gcab_kernel(x_ref, wak_ref, bak_ref, w1p_ref, aff_ref, w2_ref, b2_ref,
                 o_ref, m_sc, s_sc, pool_sc, z_sc, *, hw_valid, tile_hw):
    p = pl.program_id(1)            # pass index
    t = pl.program_id(2)            # spatial tile index
    n_t = pl.num_programs(2)
    x = x_ref[0]                    # (C, T): channels on sublanes, HW on lanes

    # TODO(synk): for C < 8 the (C, T) slabs use only C of 8 sublanes per vreg;
    # packing several spatial tiles onto the sublane axis would recover VPU and
    # load/store throughput on the elementwise gate+residual pass.

    # ---------------- pass 0: online spatial softmax + context pooling -------
    @pl.when(p == 0)
    def _pool_pass():
        @pl.when(t == 0)
        def _init():
            m_sc[...] = jnp.full(m_sc.shape, -jnp.inf, m_sc.dtype)
            s_sc[...] = jnp.zeros(s_sc.shape, s_sc.dtype)
            pool_sc[...] = jnp.zeros(pool_sc.shape, pool_sc.dtype)

        k_logit = (jnp.dot(wak_ref[1:2, :], x, preferred_element_type=jnp.float32)
                   + bak_ref[1:2, :])                    # (1, T)
        if hw_valid % tile_hw != 0:                      # static: only if HW padded
            lane = jax.lax.broadcasted_iota(jnp.int32, k_logit.shape, 1)
            k_logit = jnp.where(t * tile_hw + lane < hw_valid, k_logit, -jnp.inf)

        m_new = jnp.maximum(m_sc[...], jnp.max(k_logit, axis=-1, keepdims=True))
        alpha = jnp.exp(m_sc[...] - m_new)               # rescale of old partials
        e = jnp.exp(k_logit - m_new)                     # (1, T); padded lanes -> 0
        s_sc[...] = s_sc[...] * alpha + jnp.sum(e, axis=-1, keepdims=True)
        # Pool x directly (VPU multiply + lane reduce); the v conv is applied
        # later to the pooled column (folded into W1'), not to the (C, HW) map.
        pool_sc[...] = pool_sc[...] * alpha + jnp.sum(x * e, axis=-1, keepdims=True)
        m_sc[...] = m_new

        # -------- finalize on last tile: tiny channel MLP on pooled column ---
        @pl.when(t == n_t - 1)
        def _finalize():
            # Deferred softmax normalization: one scalar reciprocal instead of
            # an HW-wide divide.  (approx=True would also work when bf16-level
            # output precision suffices; exact keeps the 1e-5 f32 check tight.)
            y = pool_sc[...] * pl.reciprocal(s_sc[...])                 # (C, 1)
            h = (jnp.dot(w1p_ref[...], y, preferred_element_type=jnp.float32)
                 + aff_ref[:, 0:1])                                     # (Ch, 1)
            mu = jnp.mean(h, axis=0, keepdims=True)
            var = jnp.mean(jnp.square(h - mu), axis=0, keepdims=True)
            hn = (h - mu) * jax.lax.rsqrt(var + LN_EPS)
            hn = hn * aff_ref[:, 1:2] + aff_ref[:, 2:3]                 # LN affine
            hn = jnp.maximum(hn, 0.0)                                   # ReLU
            z_sc[...] = (jnp.dot(w2_ref[...], hn, preferred_element_type=jnp.float32)
                         + b2_ref[...])                                 # (C, 1)

    # ---------------- pass 1: gate + residual, written tile by tile ----------
    @pl.when(p == 1)
    def _apply_pass():
        a_logit = (jnp.dot(wak_ref[0:1, :], x, preferred_element_type=jnp.float32)
                   + bak_ref[0:1, :])                    # (1, T)
        gate = jax.nn.sigmoid(a_logit)
        o_ref[0] = (x + z_sc[...] * gate).astype(o_ref.dtype)


def gcab_forward(x, params):
    """x: (N, C, H, W) float32, NCHW (matching PyTorch)."""
    (w_ak, b_ak, w_v, b_v, w1, b1, gamma, beta, w2, b2) = params
    N, C, H, W = x.shape
    HW = H * W

    # Fold the (linear) v conv into the first channel-MLP matmul (trace time,
    # tiny): removes Wv from resident VMEM and one matmul per batch.
    w1p = jnp.dot(w1, w_v)                               # (Ch, C)
    b1p = jnp.dot(w1, b_v) + b1                          # (Ch, 1)
    aff = jnp.concatenate([b1p, gamma, beta], axis=1)    # (Ch, 3) packed affine

    # Spatial tiling: lane-dense (multiple of 128), capped so one (C, T_HW) f32
    # block stays <= ~4 MiB (in + out double buffers fit every generation,
    # including v7x's 64 MiB physical VMEM).
    t_cap = max(LANE, ((1 << 20) // max(C, 1)) // LANE * LANE)
    t_hw = min(_round_up(HW, LANE), 2048, t_cap)
    hw_pad = _round_up(HW, t_hw)
    n_t = hw_pad // t_hw

    x_flat = x.reshape(N, C, HW)                         # free reshape (NCHW contiguous)
    if hw_pad != HW:
        x_flat = jnp.pad(x_flat, ((0, 0), (0, 0), (0, hw_pad - HW)))

    resident = lambda n, p, t: (0, 0)
    kernel = functools.partial(_gcab_kernel, hw_valid=HW, tile_hw=t_hw)

    out = pl.pallas_call(
        kernel,
        out_shape=jax.ShapeDtypeStruct((N, C, hw_pad), jnp.float32),
        grid=(N, 2, n_t),
        in_specs=[
            pl.BlockSpec((1, C, t_hw), lambda n, p, t: (n, 0, t)),
            pl.BlockSpec(w_ak.shape, resident),
            pl.BlockSpec(b_ak.shape, resident),
            pl.BlockSpec(w1p.shape, resident),
            pl.BlockSpec(aff.shape, resident),
            pl.BlockSpec(w2.shape, resident),
            pl.BlockSpec(b2.shape, resident),
        ],
        # Pass 0 never writes output; pin its output block index at tile 0 so
        # no spurious HBM writeback happens before pass 1 fills each tile.
        out_specs=pl.BlockSpec((1, C, t_hw), lambda n, p, t: (n, 0, t * p)),
        scratch_shapes=[
            pltpu.VMEM((1, 1), jnp.float32),   # running max  m
            pltpu.VMEM((1, 1), jnp.float32),   # running sum  s
            pltpu.VMEM((C, 1), jnp.float32),   # pooled context (unnormalized)
            pltpu.VMEM((C, 1), jnp.float32),   # z = channel_mul_conv output
        ],
        compiler_params=pltpu.CompilerParams(
            dimension_semantics=("parallel", "arbitrary", "arbitrary"),
            vmem_limit_bytes=48 * 1024 * 1024,   # above v5e's 16 MiB scoped default
        ),
        # TODO(synk): when HW fits in a single tile, a specialized single-pass
        # variant would read x once instead of twice (pool + apply passes).
    )(x_flat, w_ak, b_ak, w1p, aff, w2, b2)

    if hw_pad != HW:
        out = out[:, :, :HW]
    return out.reshape(N, C, H, W)


# ----------------------------------------------------------------------------
# Pure-JAX reference (mirrors the PyTorch forward) for correctness check.
# ----------------------------------------------------------------------------
def gcab_reference(x, params):
    (w_ak, b_ak, w_v, b_v, w1, b1, gamma, beta, w2, b2) = params
    N, C, H, W = x.shape
    HW = H * W
    xf = x.reshape(N, C, HW)

    ak = jnp.einsum("oc,ncm->nom", w_ak, xf) + b_ak[None]      # (N, 2, HW)
    a_logit = ak[:, 0, :]                                      # (N, HW)
    k_logit = ak[:, 1, :]
    kw = jax.nn.softmax(k_logit, axis=-1)                      # (N, HW)
    v = jnp.einsum("oc,ncm->nom", w_v, xf) + b_v[None]         # (N, Ci, HW)
    y = jnp.einsum("nom,nm->no", v, kw)                        # (N, Ci)

    h = y @ w1.T + b1[:, 0]                                    # (N, Ch)
    mu = jnp.mean(h, axis=-1, keepdims=True)
    var = jnp.mean(jnp.square(h - mu), axis=-1, keepdims=True)
    hn = (h - mu) * jax.lax.rsqrt(var + LN_EPS) * gamma[:, 0] + beta[:, 0]
    hn = jnp.maximum(hn, 0.0)
    z = hn @ w2.T + b2[:, 0]                                   # (N, C)

    gate = jax.nn.sigmoid(a_logit)                             # (N, HW)
    out = xf + z[:, :, None] * gate[:, None, :]
    return out.reshape(N, C, H, W)


def make_params(key, in_channels, reduction=1):
    c = in_channels
    ci = max(c // reduction, 1)       # inter_channels
    ch = c // 2                       # hidden width of channel_mul_conv
    ks = jax.random.split(key, 12)

    def rnd(k, shape, scale=0.3):
        return scale * jax.random.normal(k, shape, jnp.float32)

    w_a = rnd(ks[0], (1, c));  b_a = rnd(ks[1], (1, 1), 0.1)
    w_k = rnd(ks[2], (1, c));  b_k = rnd(ks[3], (1, 1), 0.1)
    w_ak = jnp.concatenate([w_a, w_k], axis=0)     # (2, C)
    b_ak = jnp.concatenate([b_a, b_k], axis=0)     # (2, 1)

    w_v = rnd(ks[4], (ci, c));  b_v = rnd(ks[5], (ci, 1), 0.1)
    w1 = rnd(ks[6], (ch, ci));  b1 = rnd(ks[7], (ch, 1), 0.1)
    gamma = 1.0 + rnd(ks[8], (ch, 1), 0.1)
    beta = rnd(ks[9], (ch, 1), 0.1)
    w2 = rnd(ks[10], (c, ch));  b2 = rnd(ks[11], (c, 1), 0.1)
    return (w_ak, b_ak, w_v, b_v, w1, b1, gamma, beta, w2, b2)


if __name__ == "__main__":
    key = jax.random.PRNGKey(0)
    kx, kp = jax.random.split(key)

    N, C, H, W = 2, 4, 16, 16
    x = jax.random.normal(kx, (N, C, H, W), jnp.float32)
    params = make_params(kp, C, reduction=1)

    out = jax.block_until_ready(gcab_forward(x, params))
    ref = jax.block_until_ready(gcab_reference(x, params))

    assert out.shape == (N, C, H, W), out.shape
    assert jnp.allclose(out, ref, rtol=1e-5, atol=1e-5), (
        float(jnp.max(jnp.abs(out - ref))))

    print("KERNEL_OK")
</pallas_src>

<mosaic_0001>
module attributes {stable_mosaic.version = 11 : i64} {
  func.func @_gcab_kernel(%arg0: i32, %arg1: i32, %arg2: i32, %arg3: memref<1x4x256xf32, #tpu.memory_space<vmem>>, %arg4: memref<2x4xf32, #tpu.memory_space<vmem>>, %arg5: memref<2x1xf32, #tpu.memory_space<vmem>>, %arg6: memref<2x4xf32, #tpu.memory_space<vmem>>, %arg7: memref<2x3xf32, #tpu.memory_space<vmem>>, %arg8: memref<4x2xf32, #tpu.memory_space<vmem>>, %arg9: memref<4x1xf32, #tpu.memory_space<vmem>>, %arg10: memref<1x4x256xf32, #tpu.memory_space<vmem>>, %arg11: memref<1x1xf32, #tpu.memory_space<vmem>>, %arg12: memref<1x1xf32, #tpu.memory_space<vmem>>, %arg13: memref<4x1xf32, #tpu.memory_space<vmem>>, %arg14: memref<4x1xf32, #tpu.memory_space<vmem>>) attributes {dimension_semantics = [#tpu.dimension_semantics<parallel>, #tpu.dimension_semantics<arbitrary>, #tpu.dimension_semantics<arbitrary>], iteration_bounds = array<i64: 2, 2, 1>, scalar_prefetch = 0 : i64, scratch_operands = 4 : i64, tpu.core_type = #tpu.core_type<tc>, window_params = [{transform_indices = @transform_0, window_bounds = array<i64: 1, 4, 256>}, {pipeline_mode = #tpu.pipeline_mode<synchronous>, transform_indices = @transform_1, window_bounds = array<i64: 2, 4>}, {pipeline_mode = #tpu.pipeline_mode<synchronous>, transform_indices = @transform_2, window_bounds = array<i64: 2, 1>}, {pipeline_mode = #tpu.pipeline_mode<synchronous>, transform_indices = @transform_3, window_bounds = array<i64: 2, 4>}, {pipeline_mode = #tpu.pipeline_mode<synchronous>, transform_indices = @transform_4, window_bounds = array<i64: 2, 3>}, {pipeline_mode = #tpu.pipeline_mode<synchronous>, transform_indices = @transform_5, window_bounds = array<i64: 4, 2>}, {pipeline_mode = #tpu.pipeline_mode<synchronous>, transform_indices = @transform_6, window_bounds = array<i64: 4, 1>}, {transform_indices = @transform_7, window_bounds = array<i64: 1, 4, 256>}]} {
    %c0 = arith.constant 0 : index
    %c0_0 = arith.constant 0 : index
    %c0_1 = arith.constant 0 : index
    %0 = vector.load %arg3[%c0, %c0_0, %c0_1] : memref<1x4x256xf32, #tpu.memory_space<vmem>>, vector<1x4x256xf32>
    %1 = vector.shape_cast %0 : vector<1x4x256xf32> to vector<4x256xf32>
    %c0_i32 = arith.constant 0 : i32
    %2 = arith.cmpi eq, %arg1, %c0_i32 : i32
    %3 = arith.extui %2 : i1 to i32
    %c0_i32_2 = arith.constant 0 : i32
    %4 = arith.cmpi ne, %3, %c0_i32_2 : i32
    scf.if %4 {
      %c0_i32_4 = arith.constant 0 : i32
      %8 = arith.cmpi eq, %arg2, %c0_i32_4 : i32
      %9 = arith.extui %8 : i1 to i32
      %c0_i32_5 = arith.constant 0 : i32
      %10 = arith.cmpi ne, %9, %c0_i32_5 : i32
      scf.if %10 {
        %cst_28 = arith.constant 0xFF800000 : f32
        %45 = vector.broadcast %cst_28 : f32 to vector<1x1xf32>
        %c0_29 = arith.constant 0 : index
        %c0_30 = arith.constant 0 : index
        %46 = vector.load %arg11[%c0_29, %c0_30] : memref<1x1xf32, #tpu.memory_space<vmem>>, vector<1x1xf32>
        tpu.vector_store %arg11[%c0_29, %c0_30], %45 {strides = array<i32>} : memref<1x1xf32, #tpu.memory_space<vmem>>, vector<1x1xf32>,
        %cst_31 = arith.constant 0.000000e+00 : f32
        %47 = vector.broadcast %cst_31 : f32 to vector<1x1xf32>
        %c0_32 = arith.constant 0 : index
        %c0_33 = arith.constant 0 : index
        %48 = vector.load %arg12[%c0_32, %c0_33] : memref<1x1xf32, #tpu.memory_space<vmem>>, vector<1x1xf32>
        tpu.vector_store %arg12[%c0_32, %c0_33], %47 {strides = array<i32>} : memref<1x1xf32, #tpu.memory_space<vmem>>, vector<1x1xf32>,
        %cst_34 = arith.constant 0.000000e+00 : f32
        %49 = vector.broadcast %cst_34 : f32 to vector<4x1xf32>
        %c0_35 = arith.constant 0 : index
        %c0_36 = arith.constant 0 : index
        %50 = vector.load %arg13[%c0_35, %c0_36] : memref<4x1xf32, #tpu.memory_space<vmem>>, vector<4x1xf32>
        tpu.vector_store %arg13[%c0_35, %c0_36], %49 {strides = array<i32>} : memref<4x1xf32, #tpu.memory_space<vmem>>, vector<4x1xf32>,
      } else {
      }
      %c1 = arith.constant 1 : index
      %c0_6 = arith.constant 0 : index
      %11 = vector.load %arg4[%c1, %c0_6] : memref<2x4xf32, #tpu.memory_space<vmem>>, vector<1x4xf32>
      %cst = arith.constant dense<0.000000e+00> : vector<1x256xf32>
      %12 = tpu.matmul %11, %1, %cst {dimension_numbers = #tpu.dot_dimension_numbers<[1], [0], [0], [1], [0, 0, 1, 1], [], []>} : vector<1x4xf32>, vector<4x256xf32>, vector<1x256xf32> -> vector<1x256xf32>
      %c1_7 = arith.constant 1 : index
      %c0_8 = arith.constant 0 : index
      %13 = vector.load %arg5[%c1_7, %c0_8] : memref<2x1xf32, #tpu.memory_space<vmem>>, vector<1x1xf32>
      %14 = vector.broadcast %13 : vector<1x1xf32> to vector<1x256xf32>
      %15 = arith.addf %12, %14 : vector<1x256xf32>
      %c0_9 = arith.constant 0 : index
      %c0_10 = arith.constant 0 : index
      %16 = vector.load %arg11[%c0_9, %c0_10] : memref<1x1xf32, #tpu.memory_space<vmem>>, vector<1x1xf32>
      %cst_11 = arith.constant dense<0xFF800000> : vector<1xf32>
      %17 = vector.multi_reduction <maximumf>, %15, %cst_11 [1] : vector<1x256xf32> to vector<1xf32>
      %18 = vector.shape_cast %17 : vector<1xf32> to vector<1x1xf32>
      %19 = arith.maximumf %16, %18 : vector<1x1xf32>
      %c0_12 = arith.constant 0 : index
      %c0_13 = arith.constant 0 : index
      %20 = vector.load %arg11[%c0_12, %c0_13] : memref<1x1xf32, #tpu.memory_space<vmem>>, vector<1x1xf32>
      %21 = arith.subf %20, %19 : vector<1x1xf32>
      %22 = math.exp %21 : vector<1x1xf32>
      %23 = vector.broadcast %19 : vector<1x1xf32> to vector<1x256xf32>
      %24 = arith.subf %15, %23 : vector<1x256xf32>
      %25 = math.exp %24 : vector<1x256xf32>
      %c0_14 = arith.constant 0 : index
      %c0_15 = arith.constant 0 : index
      %26 = vector.load %arg12[%c0_14, %c0_15] : memref<1x1xf32, #tpu.memory_space<vmem>>, vector<1x1xf32>
      %27 = arith.mulf %26, %22 : vector<1x1xf32>
      %cst_16 = arith.constant dense<0.000000e+00> : vector<1xf32>
      %28 = vector.multi_reduction <add>, %25, %cst_16 [1] : vector<1x256xf32> to vector<1xf32>
      %29 = vector.shape_cast %28 : vector<1xf32> to vector<1x1xf32>
      %30 = arith.addf %27, %29 : vector<1x1xf32>
      %c0_17 = arith.constant 0 : index
      %c0_18 = arith.constant 0 : index
      %31 = vector.load %arg12[%c0_17, %c0_18] : memref<1x1xf32, #tpu.memory_space<vmem>>, vector<1x1xf32>
      tpu.vector_store %arg12[%c0_17, %c0_18], %30 {strides = array<i32>} : memref<1x1xf32, #tpu.memory_space<vmem>>, vector<1x1xf32>,
      %c0_19 = arith.constant 0 : index
      %c0_20 = arith.constant 0 : index
      %32 = vector.load %arg13[%c0_19, %c0_20] : memref<4x1xf32, #tpu.memory_space<vmem>>, vector<4x1xf32>
      %33 = vector.broadcast %22 : vector<1x1xf32> to vector<4x1xf32>
      %34 = arith.mulf %32, %33 : vector<4x1xf32>
      %35 = vector.broadcast %25 : vector<1x256xf32> to vector<4x256xf32>
      %36 = arith.mulf %1, %35 : vector<4x256xf32>
      %cst_21 = arith.constant dense<0.000000e+00> : vector<4xf32>
      %37 = vector.multi_reduction <add>, %36, %cst_21 [1] : vector<4x256xf32> to vector<4xf32>
      %38 = vector.shape_cast %37 : vector<4xf32> to vector<4x1xf32>
      %39 = arith.addf %34, %38 : vector<4x1xf32>
      %c0_22 = arith.constant 0 : index
      %c0_23 = arith.constant 0 : index
      %40 = vector.load %arg13[%c0_22, %c0_23] : memref<4x1xf32, #tpu.memory_space<vmem>>, vector<4x1xf32>
      tpu.vector_store %arg13[%c0_22, %c0_23], %39 {strides = array<i32>} : memref<4x1xf32, #tpu.memory_space<vmem>>, vector<4x1xf32>,
      %c0_24 = arith.constant 0 : index
      %c0_25 = arith.constant 0 : index
      %41 = vector.load %arg11[%c0_24, %c0_25] : memref<1x1xf32, #tpu.memory_space<vmem>>, vector<1x1xf32>
      tpu.vector_store %arg11[%c0_24, %c0_25], %19 {strides = array<i32>} : memref<1x1xf32, #tpu.memory_space<vmem>>, vector<1x1xf32>,
      %c0_i32_26 = arith.constant 0 : i32
      %42 = arith.cmpi eq, %arg2, %c0_i32_26 : i32
      %43 = arith.extui %42 : i1 to i32
      %c0_i32_27 = arith.constant 0 : i32
      %44 = arith.cmpi ne, %43, %c0_i32_27 : i32
      scf.if %44 {
        %c0_28 = arith.constant 0 : index
        %c0_29 = arith.constant 0 : index
        %45 = vector.load %arg13[%c0_28, %c0_29] : memref<4x1xf32, #tpu.memory_space<vmem>>, vector<4x1xf32>
        %c0_30 = arith.constant 0 : index
        %c0_31 = arith.constant 0 : index
        %46 = vector.load %arg12[%c0_30, %c0_31] : memref<1x1xf32, #tpu.memory_space<vmem>>, vector<1x1xf32>
        %47 = tpu.reciprocal %46 : vector<1x1xf32> -> vector<1x1xf32>
        %48 = vector.broadcast %47 : vector<1x1xf32> to vector<4x1xf32>
        %49 = arith.mulf %45, %48 : vector<4x1xf32>
        %c0_32 = arith.constant 0 : index
        %c0_33 = arith.constant 0 : index
        %50 = vector.load %arg6[%c0_32, %c0_33] : memref<2x4xf32, #tpu.memory_space<vmem>>, vector<2x4xf32>
        %cst_34 = arith.constant dense<0.000000e+00> : vector<2x1xf32>
        %51 = tpu.matmul %50, %49, %cst_34 {dimension_numbers = #tpu.dot_dimension_numbers<[1], [0], [0], [1], [0, 0, 1, 1], [], []>} : vector<2x4xf32>, vector<4x1xf32>, vector<2x1xf32> -> vector<2x1xf32>
        %c0_35 = arith.constant 0 : index
        %c0_36 = arith.constant 0 : index
        %52 = vector.load %arg7[%c0_35, %c0_36] : memref<2x3xf32, #tpu.memory_space<vmem>>, vector<2x1xf32>
        %53 = arith.addf %51, %52 : vector<2x1xf32>
        %cst_37 = arith.constant dense<0.000000e+00> : vector<1xf32>
        %54 = vector.multi_reduction <add>, %53, %cst_37 [0] : vector<2x1xf32> to vector<1xf32>
        %55 = vector.shape_cast %54 : vector<1xf32> to vector<1x1xf32>
        %cst_38 = arith.constant 2.000000e+00 : f32
        %56 = vector.broadcast %cst_38 : f32 to vector<1x1xf32>
        %57 = arith.divf %55, %56 : vector<1x1xf32>
        %58 = vector.broadcast %57 : vector<1x1xf32> to vector<2x1xf32>
        %59 = arith.subf %53, %58 : vector<2x1xf32>
        %60 = arith.mulf %59, %59 : vector<2x1xf32>
        %cst_39 = arith.constant dense<0.000000e+00> : vector<1xf32>
        %61 = vector.multi_reduction <add>, %60, %cst_39 [0] : vector<2x1xf32> to vector<1xf32>
        %62 = vector.shape_cast %61 : vector<1xf32> to vector<1x1xf32>
        %cst_40 = arith.constant 2.000000e+00 : f32
        %63 = vector.broadcast %cst_40 : f32 to vector<1x1xf32>
        %64 = arith.divf %62, %63 : vector<1x1xf32>
        %65 = vector.broadcast %57 : vector<1x1xf32> to vector<2x1xf32>
        %66 = arith.subf %53, %65 : vector<2x1xf32>
        %cst_41 = arith.constant 9.99999974E-6 : f32
        %67 = vector.broadcast %cst_41 : f32 to vector<1x1xf32>
        %68 = arith.addf %64, %67 : vector<1x1xf32>
        %69 = math.rsqrt %68 : vector<1x1xf32>
        %70 = vector.broadcast %69 : vector<1x1xf32> to vector<2x1xf32>
        %71 = arith.mulf %66, %70 : vector<2x1xf32>
        %c0_42 = arith.constant 0 : index
        %c1_43 = arith.constant 1 : index
        %72 = vector.load %arg7[%c0_42, %c1_43] : memref<2x3xf32, #tpu.memory_space<vmem>>, vector<2x1xf32>
        %73 = arith.mulf %71, %72 : vector<2x1xf32>
        %c0_44 = arith.constant 0 : index
        %c2 = arith.constant 2 : index
        %74 = vector.load %arg7[%c0_44, %c2] : memref<2x3xf32, #tpu.memory_space<vmem>>, vector<2x1xf32>
        %75 = arith.addf %73, %74 : vector<2x1xf32>
        %cst_45 = arith.constant 0.000000e+00 : f32
        %76 = vector.broadcast %cst_45 : f32 to vector<2x1xf32>
        %77 = arith.maximumf %75, %76 : vector<2x1xf32>
        %c0_46 = arith.constant 0 : index
        %c0_47 = arith.constant 0 : index
        %78 = vector.load %arg8[%c0_46, %c0_47] : memref<4x2xf32, #tpu.memory_space<vmem>>, vector<4x2xf32>
        %cst_48 = arith.constant dense<0.000000e+00> : vector<4x1xf32>
        %79 = tpu.matmul %78, %77, %cst_48 {dimension_numbers = #tpu.dot_dimension_numbers<[1], [0], [0], [1], [0, 0, 1, 1], [], []>} : vector<4x2xf32>, vector<2x1xf32>, vector<4x1xf32> -> vector<4x1xf32>
        %c0_49 = arith.constant 0 : index
        %c0_50 = arith.constant 0 : index
        %80 = vector.load %arg9[%c0_49, %c0_50] : memref<4x1xf32, #tpu.memory_space<vmem>>, vector<4x1xf32>
        %81 = arith.addf %79, %80 : vector<4x1xf32>
        %c0_51 = arith.constant 0 : index
        %c0_52 = arith.constant 0 : index
        %82 = vector.load %arg14[%c0_51, %c0_52] : memref<4x1xf32, #tpu.memory_space<vmem>>, vector<4x1xf32>
        tpu.vector_store %arg14[%c0_51, %c0_52], %81 {strides = array<i32>} : memref<4x1xf32, #tpu.memory_space<vmem>>, vector<4x1xf32>,
      } else {
      }
    } else {
    }
    %c1_i32 = arith.constant 1 : i32
    %5 = arith.cmpi eq, %arg1, %c1_i32 : i32
    %6 = arith.extui %5 : i1 to i32
    %c0_i32_3 = arith.constant 0 : i32
    %7 = arith.cmpi ne, %6, %c0_i32_3 : i32
    scf.if %7 {
      %c0_4 = arith.constant 0 : index
      %c0_5 = arith.constant 0 : index
      %8 = vector.load %arg4[%c0_4, %c0_5] : memref<2x4xf32, #tpu.memory_space<vmem>>, vector<1x4xf32>
      %cst = arith.constant dense<0.000000e+00> : vector<1x256xf32>
      %9 = tpu.matmul %8, %1, %cst {dimension_numbers = #tpu.dot_dimension_numbers<[1], [0], [0], [1], [0, 0, 1, 1], [], []>} : vector<1x4xf32>, vector<4x256xf32>, vector<1x256xf32> -> vector<1x256xf32>
      %c0_6 = arith.constant 0 : index
      %c0_7 = arith.constant 0 : index
      %10 = vector.load %arg5[%c0_6, %c0_7] : memref<2x1xf32, #tpu.memory_space<vmem>>, vector<1x1xf32>
      %11 = vector.broadcast %10 : vector<1x1xf32> to vector<1x256xf32>
      %12 = arith.addf %9, %11 : vector<1x256xf32>
      %13 = arith.negf %12 : vector<1x256xf32>
      %14 = math.exp %13 : vector<1x256xf32>
      %cst_8 = arith.constant 1.000000e+00 : f32
      %15 = vector.broadcast %cst_8 : f32 to vector<1x256xf32>
      %16 = arith.addf %15, %14 : vector<1x256xf32>
      %17 = arith.divf %15, %16 : vector<1x256xf32>
      %c0_9 = arith.constant 0 : index
      %c0_10 = arith.constant 0 : index
      %18 = vector.load %arg14[%c0_9, %c0_10] : memref<4x1xf32, #tpu.memory_space<vmem>>, vector<4x1xf32>
      %19 = vector.broadcast %18 : vector<4x1xf32> to vector<4x256xf32>
      %20 = vector.broadcast %17 : vector<1x256xf32> to vector<4x256xf32>
      %21 = arith.mulf %19, %20 : vector<4x256xf32>
      %22 = arith.addf %1, %21 : vector<4x256xf32>
      %c0_11 = arith.constant 0 : index
      %c0_12 = arith.constant 0 : index
      %c0_13 = arith.constant 0 : index
      %23 = vector.load %arg10[%c0_11, %c0_12, %c0_13] : memref<1x4x256xf32, #tpu.memory_space<vmem>>, vector<1x4x256xf32>
      %24 = vector.shape_cast %23 : vector<1x4x256xf32> to vector<4x256xf32>
      %25 = vector.shape_cast %22 : vector<4x256xf32> to vector<1x4x256xf32>
      tpu.vector_store %arg10[%c0_11, %c0_12, %c0_13], %25 {strides = array<i32>} : memref<1x4x256xf32, #tpu.memory_space<vmem>>, vector<1x4x256xf32>,
    } else {
    }
    return
  }
  func.func @transform_0(%arg0: i32, %arg1: i32, %arg2: i32) -> (i32, i32, i32) {
    %c0_i32 = arith.constant 0 : i32
    %c0_i32_0 = arith.constant 0 : i32
    return %arg0, %c0_i32, %arg2 : i32, i32, i32
  }
  func.func @transform_1(%arg0: i32, %arg1: i32, %arg2: i32) -> (i32, i32) {
    %c0_i32 = arith.constant 0 : i32
    %c0_i32_0 = arith.constant 0 : i32
    %c0_i32_1 = arith.constant 0 : i32
    return %c0_i32, %c0_i32_0 : i32, i32
  }
  func.func @transform_2(%arg0: i32, %arg1: i32, %arg2: i32) -> (i32, i32) {
    %c0_i32 = arith.constant 0 : i32
    %c0_i32_0 = arith.constant 0 : i32
    %c0_i32_1 = arith.constant 0 : i32
    return %c0_i32, %c0_i32_0 : i32, i32
  }
  func.func @transform_3(%arg0: i32, %arg1: i32, %arg2: i32) -> (i32, i32) {
    %c0_i32 = arith.constant 0 : i32
    %c0_i32_0 = arith.constant 0 : i32
    %c0_i32_1 = arith.constant 0 : i32
    return %c0_i32, %c0_i32_0 : i32, i32
  }
  func.func @transform_4(%arg0: i32, %arg1: i32, %arg2: i32) -> (i32, i32) {
    %c0_i32 = arith.constant 0 : i32
    %c0_i32_0 = arith.constant 0 : i32
    %c0_i32_1 = arith.constant 0 : i32
    return %c0_i32, %c0_i32_0 : i32, i32
  }
  func.func @transform_5(%arg0: i32, %arg1: i32, %arg2: i32) -> (i32, i32) {
    %c0_i32 = arith.constant 0 : i32
    %c0_i32_0 = arith.constant 0 : i32
    %c0_i32_1 = arith.constant 0 : i32
    return %c0_i32, %c0_i32_0 : i32, i32
  }
  func.func @transform_6(%arg0: i32, %arg1: i32, %arg2: i32) -> (i32, i32) {
    %c0_i32 = arith.constant 0 : i32
    %c0_i32_0 = arith.constant 0 : i32
    %c0_i32_1 = arith.constant 0 : i32
    return %c0_i32, %c0_i32_0 : i32, i32
  }
  func.func @transform_7(%arg0: i32, %arg1: i32, %arg2: i32) -> (i32, i32, i32) {
    %0 = arith.muli %arg2, %arg1 : i32
    %c0_i32 = arith.constant 0 : i32
    %c0_i32_0 = arith.constant 0 : i32
    return %arg0, %c0_i32, %0 : i32, i32, i32
  }
}

</mosaic_0001>

<llo_original>
// kernel: tpu_custom_call.1
$region0: #{tpu_custom_call.1}
  #allocation0 [shape = 'u32[]', space=smem, size = 0x4, offset = 0x4, fixed_abs, tag = 'smem constant byte address 0x4 - core index']
  #allocation1 [shape = 'u32[144,128]{1,0:T(1,128)}', space=vmem, size = 0x12000, scoped, tag = 'internal scratch']
  #allocation2 [shape = 'f32[1,1]{1,0:T(1,128)}', space=vmem, size = 0x200, scoped, tag = 'scratch operand']
  #allocation3 [shape = 'f32[1,1]{1,0:T(1,128)}', space=vmem, size = 0x200, scoped, tag = 'scratch operand']
  #allocation4 [shape = 'f32[4,1]{1,0:T(4,128)}', space=vmem, size = 0x800, scoped, tag = 'scratch operand']
  #allocation5 [shape = 'f32[4,1]{1,0:T(4,128)}', space=vmem, size = 0x800, scoped, tag = 'scratch operand']
  %s0 = inlined_call_operand.hbm [shape: f32[2,4,256], index: 0, kind: input, shape index: {}]
  %s1 = inlined_call_operand.vmem [shape: f32[2,4], index: 1, kind: input, shape index: {}]
  %s2 = inlined_call_operand.vmem [shape: f32[2,1], index: 2, kind: input, shape index: {}]
  %s3 = inlined_call_operand.vmem [shape: f32[2,4], index: 3, kind: input, shape index: {}]
  %s4 = inlined_call_operand.vmem [shape: f32[2,3], index: 4, kind: input, shape index: {}]
  %s5 = inlined_call_operand.vmem [shape: f32[4,2], index: 5, kind: input, shape index: {}]
  %s6 = inlined_call_operand.vmem [shape: f32[4,1], index: 6, kind: input, shape index: {}]
  %s7 = inlined_call_operand.hbm [shape: f32[2,4,256], index: 7, kind: output, shape index: {}]
  %s8 = sld [smem:[#allocation0]]
  $region81: #{tpu_custom_call.1} parent=0
    _
  %s10 = ssub.s32 1, %s8
  %s11 = scalar_select 0, %s10, %s8
  $region1: #{tpu_custom_call.1} parent=0
    #allocation6 [shape = 'u8[8192]{0}', space=vmem, size = 0x2000, scoped, tag = 'input window, operand 0']
    #allocation7 [shape = 's32[2]{0}', space=sflag, size = 0x8, scoped, tag = 'scoped memory for tpu_custom_call.1']
    #allocation8 [shape = 's32[2]{0}', space=sflag, size = 0x8, scoped, tag = 'scoped memory for tpu_custom_call.1']
    #allocation9 [shape = 'u8[8192]{0}', space=vmem, size = 0x2000, scoped, tag = 'output window, operand 0']
    %12 = vsyncpa [#allocation7], 0
    %s13 = scalar_lea.sflag [#allocation7], 1
    %14 = vsyncpa %s13, 0
    %15 = vsyncpa [#allocation8], 0
    %s16 = scalar_lea.sflag [#allocation8], 1
    %17 = vsyncpa %s16, 0
    loop: start=0, step=1, limit=6
    $region2: #{tpu_custom_call.1} parent=1 // loop_pre_header
      _
    $region3: #{tpu_custom_call.1} parent=1 // loop_header
      %s19 = sphi 0, %s23
      %p20 = scmp.ge.s32.totalorder %s19, 6
      %s26 = sphi 0, %s45
      %s27 = sphi 0, %s41
      %s28 = sphi 0, %s37
      %s29 = sphi 0, %s26
      %s30 = sphi 0, %s27
      %s31 = sphi 0, %s28
      %s32 = sphi 0, %s29
      %s33 = sphi 0, %s30
      %s34 = sphi 0, %s31
      %s50 = sphi 0, %s52
      %s53 = sphi 0, %s50
      %s54 = sphi 0, %s53
      %s70 = sphi 0, %s54
      %s74 = sphi 0, %s74
      %s76 = sphi 0, %s74
      %s77 = sphi 0, %s76
      %s91 = sphi 0, %s77
      %s95 = sphi 0, %s95
      %s97 = sphi 0, %s95
      %s98 = sphi 0, %s97
      %s112 = sphi 0, %s98
      %s116 = sphi 0, %s116
      %s118 = sphi 0, %s116
      %s119 = sphi 0, %s118
      %s133 = sphi 0, %s119
      %s137 = sphi 0, %s137
      %s139 = sphi 0, %s137
      %s140 = sphi 0, %s139
      %s154 = sphi 0, %s140
      %s158 = sphi 0, %s158
      %s160 = sphi 0, %s158
      %s161 = sphi 0, %s160
      %s175 = sphi 0, %s161
      %s179 = sphi 0, %s179
      %s181 = sphi 0, %s179
      %s182 = sphi 0, %s181
      %s196 = sphi 0, %s182
      %s206 = sphi 0, %s208
      %s209 = sphi 0, %s206
      %s210 = sphi 0, %s209
      %s226 = sphi 0, %s210
    $region4: #{tpu_custom_call.1} parent=1 // loop_header_branch
      %22 = sbr.rel (%p20) target = $region8
    $region5: #{tpu_custom_call.1} parent=1 // loop_body
      %s24 = ssub.s32 %s19, 1
      %s25 = ssub.s32 %s19, 2
      %s35 = sadd.s32 1, %s28
      %p36 = scmp.ge.s32.totalorder %s35, 1
      %s37 = scalar_select %p36, 0, %s35
      %s38 = sadd.s32 1, %s27
      %s39 = scalar_select %p36, %s38, %s27
      %p40 = scmp.ge.s32.totalorder %s39, 2
      %s41 = scalar_select %p40, 0, %s39
      %s42 = sadd.s32 1, %s26
      %s43 = scalar_select %p40, %s42, %s26
      %p44 = scmp.ge.s32.totalorder %s43, 2
      %s45 = scalar_select %p44, 0, %s43
      %s46 = ssub.s32 %s26, %s45
      %s47 = ssub.s32 %s28, %s37
      %s48 = sor.u32 %s46, %s47
      %p49 = scmp.eq.s32.totalorder %s48, 0
      %s51 = sadd.s32 %s50, 1
      %s52 = scalar_select %p49, %s50, %s51
      %p55 = pneg %p49
      %p56 = scmp.eq.s32.totalorder %s19, 3
      %p57 = por %p55, %p56
      %p58 = scmp.ne.s32.totalorder %s50, %s53
      %p59 = scmp.eq.s32.totalorder %s19, 0
      %p60 = por %p58, %p59
      %p61 = scmp.ne.s32.totalorder %s50, %s53
      %p62 = scmp.eq.s32.totalorder %s24, 3
      %p63 = por %p61, %p62
      %p64 = scmp.ne.s32.totalorder %s53, %s54
      %p65 = scmp.eq.s32.totalorder %s24, 0
      %p66 = por %p64, %p65
      %p67 = scmp.ne.s32.totalorder %s53, %s54
      %p68 = scmp.eq.s32.totalorder %s25, 3
      %p69 = por %p67, %p68
      %p71 = scmp.ne.s32.totalorder %s54, %s70
      %p72 = scmp.eq.s32.totalorder %s25, 0
      %p73 = por %p71, %p72
      %s75 = sadd.s32 %s74, 1
      %p78 = scmp.eq.s32.totalorder %s19, 3
      %p79 = scmp.ne.s32.totalorder %s74, %s76
      %p80 = scmp.eq.s32.totalorder %s19, 0
      %p81 = por %p79, %p80
      %p82 = scmp.ne.s32.totalorder %s74, %s76
      %p83 = scmp.eq.s32.totalorder %s24, 3
      %p84 = por %p82, %p83
      %p85 = scmp.ne.s32.totalorder %s76, %s77
      %p86 = scmp.eq.s32.totalorder %s24, 0
      %p87 = por %p85, %p86
      %p88 = scmp.ne.s32.totalorder %s76, %s77
      %p89 = scmp.eq.s32.totalorder %s25, 3
      %p90 = por %p88, %p89
      %p92 = scmp.ne.s32.totalorder %s77, %s91
      %p93 = scmp.eq.s32.totalorder %s25, 0
      %p94 = por %p92, %p93
      %s96 = sadd.s32 %s95, 1
      %p99 = scmp.eq.s32.totalorder %s19, 3
      %p100 = scmp.ne.s32.totalorder %s95, %s97
      %p101 = scmp.eq.s32.totalorder %s19, 0
      %p102 = por %p100, %p101
      %p103 = scmp.ne.s32.totalorder %s95, %s97
      %p104 = scmp.eq.s32.totalorder %s24, 3
      %p105 = por %p103, %p104
      %p106 = scmp.ne.s32.totalorder %s97, %s98
      %p107 = scmp.eq.s32.totalorder %s24, 0
      %p108 = por %p106, %p107
      %p109 = scmp.ne.s32.totalorder %s97, %s98
      %p110 = scmp.eq.s32.totalorder %s25, 3
      %p111 = por %p109, %p110
      %p113 = scmp.ne.s32.totalorder %s98, %s112
      %p114 = scmp.eq.s32.totalorder %s25, 0
      %p115 = por %p113, %p114
      %s117 = sadd.s32 %s116, 1
      %p120 = scmp.eq.s32.totalorder %s19, 3
      %p121 = scmp.ne.s32.totalorder %s116, %s118
      %p122 = scmp.eq.s32.totalorder %s19, 0
      %p123 = por %p121, %p122
      %p124 = scmp.ne.s32.totalorder %s116, %s118
      %p125 = scmp.eq.s32.totalorder %s24, 3
      %p126 = por %p124, %p125
      %p127 = scmp.ne.s32.totalorder %s118, %s119
      %p128 = scmp.eq.s32.totalorder %s24, 0
      %p129 = por %p127, %p128
      %p130 = scmp.ne.s32.totalorder %s118, %s119
      %p131 = scmp.eq.s32.totalorder %s25, 3
      %p132 = por %p130, %p131
      %p134 = scmp.ne.s32.totalorder %s119, %s133
      %p135 = scmp.eq.s32.totalorder %s25, 0
      %p136 = por %p134, %p135
      %s138 = sadd.s32 %s137, 1
      %p141 = scmp.eq.s32.totalorder %s19, 3
      %p142 = scmp.ne.s32.totalorder %s137, %s139
      %p143 = scmp.eq.s32.totalorder %s19, 0
      %p144 = por %p142, %p143
      %p145 = scmp.ne.s32.totalorder %s137, %s139
      %p146 = scmp.eq.s32.totalorder %s24, 3
      %p147 = por %p145, %p146
      %p148 = scmp.ne.s32.totalorder %s139, %s140
      %p149 = scmp.eq.s32.totalorder %s24, 0
      %p150 = por %p148, %p149
      %p151 = scmp.ne.s32.totalorder %s139, %s140
      %p152 = scmp.eq.s32.totalorder %s25, 3
      %p153 = por %p151, %p152
      %p155 = scmp.ne.s32.totalorder %s140, %s154
      %p156 = scmp.eq.s32.totalorder %s25, 0
      %p157 = por %p155, %p156
      %s159 = sadd.s32 %s158, 1
      %p162 = scmp.eq.s32.totalorder %s19, 3
      %p163 = scmp.ne.s32.totalorder %s158, %s160
      %p164 = scmp.eq.s32.totalorder %s19, 0
      %p165 = por %p163, %p164
      %p166 = scmp.ne.s32.totalorder %s158, %s160
      %p167 = scmp.eq.s32.totalorder %s24, 3
      %p168 = por %p166, %p167
      %p169 = scmp.ne.s32.totalorder %s160, %s161
      %p170 = scmp.eq.s32.totalorder %s24, 0
      %p171 = por %p169, %p170
      %p172 = scmp.ne.s32.totalorder %s160, %s161
      %p173 = scmp.eq.s32.totalorder %s25, 3
      %p174 = por %p172, %p173
      %p176 = scmp.ne.s32.totalorder %s161, %s175
      %p177 = scmp.eq.s32.totalorder %s25, 0
      %p178 = por %p176, %p177
      %s180 = sadd.s32 %s179, 1
      %p183 = scmp.eq.s32.totalorder %s19, 3
      %p184 = scmp.ne.s32.totalorder %s179, %s181
      %p185 = scmp.eq.s32.totalorder %s19, 0
      %p186 = por %p184, %p185
      %p187 = scmp.ne.s32.totalorder %s179, %s181
      %p188 = scmp.eq.s32.totalorder %s24, 3
      %p189 = por %p187, %p188
      %p190 = scmp.ne.s32.totalorder %s181, %s182
      %p191 = scmp.eq.s32.totalorder %s24, 0
      %p192 = por %p190, %p191
      %p193 = scmp.ne.s32.totalorder %s181, %s182
      %p194 = scmp.eq.s32.totalorder %s25, 3
      %p195 = por %p193, %p194
      %p197 = scmp.ne.s32.totalorder %s182, %s196
      %p198 = scmp.eq.s32.totalorder %s25, 0
      %p199 = por %p197, %p198
      %s200 = smul.u32 %s28, %s27
      %s201 = smul.u32 %s37, %s41
      %s202 = ssub.s32 %s26, %s45
      %s203 = ssub.s32 %s200, %s201
      %s204 = sor.u32 %s202, %s203
      %p205 = scmp.eq.s32.totalorder %s204, 0
      %s207 = sadd.s32 %s206, 1
      %s208 = scalar_select %p205, %s206, %s207
      %p211 = pneg %p205
      %p212 = scmp.eq.s32.totalorder %s19, 3
      %p213 = por %p211, %p212
      %p214 = scmp.ne.s32.totalorder %s206, %s209
      %p215 = scmp.eq.s32.totalorder %s19, 0
      %p216 = por %p214, %p215
      %p217 = scmp.ne.s32.totalorder %s206, %s209
      %p218 = scmp.eq.s32.totalorder %s24, 3
      %p219 = por %p217, %p218
      %p220 = scmp.ne.s32.totalorder %s209, %s210
      %p221 = scmp.eq.s32.totalorder %s24, 0
      %p222 = por %p220, %p221
      %p223 = scmp.ne.s32.totalorder %s209, %s210
      %p224 = scmp.eq.s32.totalorder %s25, 3
      %p225 = por %p223, %p224
      %p227 = scmp.ne.s32.totalorder %s210, %s226
      %p228 = scmp.eq.s32.totalorder %s25, 0
      %p229 = por %p227, %p228
      %p230 = scmp.le.s32.totalorder 1, %s19
      %p231 = scmp.lt.s32.totalorder %s19, 5
      %p232 = pnand %p230, %p231
      %p233 = pneg %p232
      // Predicated region
      $region9: #{tpu_custom_call.1} parent=5 // pred_check
        _
      $region10: #{tpu_custom_call.1} parent=5 // pred_check_branch
        %235 = sbr.rel (%p232) target = $region12
      $region11: #{tpu_custom_call.1} parent=5 // pred_region
        %s236 = ssub.s32 %s19, 1
        // Predicated region
        $region13: #{tpu_custom_call.1} parent=11 // pred_check
          %p237 = pneg %p87
        $region14: #{tpu_custom_call.1} parent=11 // pred_check_branch
          %239 = sbr.rel (%p237) target = $region16
        $region15: #{tpu_custom_call.1} parent=11 // pred_region
          _
        $region16: #{tpu_custom_call.1} parent=11 // pred_fallthru
          _
        // Predicated region
        $region17: #{tpu_custom_call.1} parent=11 // pred_check
          %p240 = pneg %p108
        $region18: #{tpu_custom_call.1} parent=11 // pred_check_branch
          %242 = sbr.rel (%p240) target = $region20
        $region19: #{tpu_custom_call.1} parent=11 // pred_region
          _
        $region20: #{tpu_custom_call.1} parent=11 // pred_fallthru
          _
        // Predicated region
        $region21: #{tpu_custom_call.1} parent=11 // pred_check
          %p243 = pneg %p129
        $region22: #{tpu_custom_call.1} parent=11 // pred_check_branch
          %245 = sbr.rel (%p243) target = $region24
        $region23: #{tpu_custom_call.1} parent=11 // pred_region
          _
        $region24: #{tpu_custom_call.1} parent=11 // pred_fallthru
          _
        // Predicated region
        $region25: #{tpu_custom_call.1} parent=11 // pred_check
          %p246 = pneg %p150
        $region26: #{tpu_custom_call.1} parent=11 // pred_check_branch
          %248 = sbr.rel (%p246) target = $region28
        $region27: #{tpu_custom_call.1} parent=11 // pred_region
          _
        $region28: #{tpu_custom_call.1} parent=11 // pred_fallthru
          _
        // Predicated region
        $region29: #{tpu_custom_call.1} parent=11 // pred_check
          %p249 = pneg %p171
        $region30: #{tpu_custom_call.1} parent=11 // pred_check_branch
          %251 = sbr.rel (%p249) target = $region32
        $region31: #{tpu_custom_call.1} parent=11 // pred_region
          _
        $region32: #{tpu_custom_call.1} parent=11 // pred_fallthru
          _
        // Predicated region
        $region33: #{tpu_custom_call.1} parent=11 // pred_check
          %p252 = pneg %p192
        $region34: #{tpu_custom_call.1} parent=11 // pred_check_branch
          %254 = sbr.rel (%p252) target = $region36
        $region35: #{tpu_custom_call.1} parent=11 // pred_region
          _
        $region36: #{tpu_custom_call.1} parent=11 // pred_fallthru
          _
      $region12: #{tpu_custom_call.1} parent=5 // pred_fallthru
        _
      %p255 = scmp.lt.s32.totalorder %s19, 4
      // Predicated region
      $region37: #{tpu_custom_call.1} parent=5 // pred_check
        %p256 = pneg %p255
      $region38: #{tpu_custom_call.1} parent=5 // pred_check_branch
        %258 = sbr.rel (%p256) target = $region40
      $region39: #{tpu_custom_call.1} parent=5 // pred_region
        // Predicated region
        $region41: #{tpu_custom_call.1} parent=39 // pred_check
          %p259 = pneg %p60
        $region42: #{tpu_custom_call.1} parent=39 // pred_check_branch
          %261 = sbr.rel (%p259) target = $region44
        $region43: #{tpu_custom_call.1} parent=39 // pred_region
          %s262 = sand.u32 %s50, 1
          %s263 = scalar_lea.sflag [#allocation7], %s262
          %s264 = sand.u32 %s50, 1
          %s265 = smul.addr %s264, 8
          %s266 = scalar_lea.vmem [#allocation6], %s265
          %s267 = smul.u32 2, %s28
          %s269 = ssub.s32 128, 128
          %270 = vsyncadd %s263, %s269
          %s271 = smul.addr %s26, 2
          %s272 = sadd.s32 %s267, %s271
          %s273 = smul.addr %s272, 64
          %s274 = scalar_lea.hbm %s0, %s273
          %s276 = sshll.u32 %s266, 4
          %s277 = int_to_ptr.vmem [resolvable:$true] %s276
          %279 = dma.hbm_to_vmem [thread:$0]  %s274, 128, %s277, %s263
        $region44: #{tpu_custom_call.1} parent=39 // pred_fallthru
          _
      $region40: #{tpu_custom_call.1} parent=5 // pred_fallthru
        _
      %p280 = scmp.le.s32.totalorder 1, %s19
      %p281 = scmp.lt.s32.totalorder %s19, 5
      %p282 = pnand %p280, %p281
      %p283 = pneg %p282
      // Predicated region
      $region45: #{tpu_custom_call.1} parent=5 // pred_check
        _
      $region46: #{tpu_custom_call.1} parent=5 // pred_check_branch
        %285 = sbr.rel (%p282) target = $region48
      $region47: #{tpu_custom_call.1} parent=5 // pred_region
        %s286 = ssub.s32 %s19, 1
        %s287 = sand.u32 %s53, 1
        %s288 = scalar_lea.sflag [#allocation7], %s287
        %s289 = sand.u32 %s53, 1
        %s290 = smul.addr %s289, 8
        %s291 = scalar_lea.vmem [#allocation6], %s290
        // Predicated region
        $region49: #{tpu_custom_call.1} parent=47 // pred_check
          %p292 = pneg %p66
        $region50: #{tpu_custom_call.1} parent=47 // pred_check_branch
          %294 = sbr.rel (%p292) target = $region52
        $region51: #{tpu_custom_call.1} parent=47 // pred_region
          %295 = dma.done %s288, 128
        $region52: #{tpu_custom_call.1} parent=47 // pred_fallthru
          _
        %s296 = sand.u32 %s53, 1
        %s297 = scalar_lea.sflag [#allocation7], %s296
        %s298 = sand.u32 %s53, 1
        %s299 = smul.addr %s298, 8
        %s300 = scalar_lea.vmem [#allocation6], %s299
        %p301 = pneg %p66
        %p302 = pneg %p63
        %p303 = pneg %p87
        %p304 = pneg %p84
        %p305 = pneg %p108
        %p306 = pneg %p105
        %p307 = pneg %p129
        %p308 = pneg %p126
        %p309 = pneg %p150
        %p310 = pneg %p147
        %p311 = pneg %p171
        %p312 = pneg %p168
        %p313 = pneg %p192
        %p314 = pneg %p189
        %p315 = pneg %p222
        %p316 = pneg %p219
        %s317 = sand.u32 %s209, 1
        %s318 = scalar_lea.sflag [#allocation8], %s317
        %s319 = sand.u32 %s209, 1
        %s320 = smul.addr %s319, 8
        %s321 = scalar_lea.vmem [#allocation9], %s320
        %s322 = smul.u32 2, %s31
        %s323 = smul.u32 %s31, %s30
        %s324 = smul.u32 2, %s323
        %v325 = vld [vmem:[%s291] sm:$0xff]
        %p326 = scmp.eq.s32.totalorder %s30, 0
        // Predicated region
        $region53: #{tpu_custom_call.1} parent=47 // pred_check
          %p327 = pneg %p326
        $region54: #{tpu_custom_call.1} parent=47 // pred_check_branch
          %329 = sbr.rel (%p327) target = $region56
        $region55: #{tpu_custom_call.1} parent=47 // pred_region
          %p330 = scmp.eq.s32.totalorder %s31, 0
          // Predicated region
          $region57: #{tpu_custom_call.1} parent=55 // pred_check
            %p331 = pneg %p330
          $region58: #{tpu_custom_call.1} parent=55 // pred_check_branch
            %333 = sbr.rel (%p331) target = $region60
          $region59: #{tpu_custom_call.1} parent=55 // pred_region
            %vm334 = vcmask 0
            %335 = vst.msk [vmem:[#allocation2] sm:$0x1] %vm334, -inf
            %336 = vst.msk [vmem:[#allocation3] sm:$0x1] %vm334, 0.0
            %vm337 = vcmask 3072
            %338 = vst.msk [vmem:[#allocation4] sm:$0xf] %vm337, 0.0
          $region60: #{tpu_custom_call.1} parent=55 // pred_fallthru
            _
          %v339 = vld [vmem:[%s1 + $0x1] sm:$0x1]
          %v340 = vld [vmem:[%s2 + $0x1] sm:$0x1]
          %342 = vset.pattern.permute.xlu0 0
          %343 = vperm.xlu0 %342, %v340
          %v344 = vpop.permute.xlu0 %343
          %v347 = vcombine.high %v325, %v325
          %vm348 = vcmask 31744
          %v350 = vsel %vm348, %v339, 0
          %vm352 = vcmask 1043456
          %v353 = vsel %vm352, %v325, 0
          %v355 = vsel %vm352, %v347, 0
          %357 = vmatprep.subr.mxu0 0.0
          %358 = vmatpush1.msra.mxu0 0.0
          %359 = vmatprep.subr.mxu0 0.0
          %360 = vmatpush1.msra.mxu0 0.0
          %361 = vmatprep.subr.mxu0 0.0
          %362 = vmatpush1.msra.mxu0 0.0
          %363 = vmatprep.subr.mxu0 0.0
          %364 = vmatpush1.msra.mxu0 0.0
          %365 = vmatprep.subr.mxu0 0.0
          %366 = vmatpush1.msra.mxu0 0.0
          %367 = vmatprep.subr.mxu0 0.0
          %368 = vmatpush1.msra.mxu0 0.0
          %369 = vmatprep.subr.mxu0 0.0
          %370 = vmatpush1.msra.mxu0 0.0
          %371 = vmatprep.subr.mxu0 0.0
          %372 = vmatpush1.msra.mxu0 0.0
          %373 = vmatprep.subr.mxu0 0.0
          %374 = vmatpush1.msra.mxu0 0.0
          %375 = vmatprep.subr.mxu0 0.0
          %376 = vmatpush1.msra.mxu0 0.0
          %377 = vmatprep.subr.mxu0 0.0
          %378 = vmatpush1.msra.mxu0 0.0
          %379 = vmatprep.subr.mxu0 0.0
          %380 = vmatpush1.msra.mxu0 0.0
          %381 = vmatprep.subr.mxu0 0.0
          %382 = vmatpush1.msra.mxu0 0.0
          %383 = vmatprep.subr.mxu0 0.0
          %384 = vmatpush1.msra.mxu0 0.0
          %385 = vmatprep.subr.mxu0 0.0
          %386 = vmatpush1.msra.mxu0 0.0
          %387 = vmatprep.subr.mxu0 %v355
          %388 = vmatpush1.msra.mxu0 %v353
          %389 = vmatprep.subr.mxu0 0.0
          %390 = vmatpush2.msra.mxu0 0.0
          %391 = vmatprep.subr.mxu0 0.0
          %392 = vmatpush2.msra.mxu0 0.0
          %393 = vmatprep.subr.mxu0 0.0
          %394 = vmatpush2.msra.mxu0 0.0
          %395 = vmatprep.subr.mxu0 0.0
          %396 = vmatpush2.msra.mxu0 0.0
          %397 = vmatprep.subr.mxu0 0.0
          %398 = vmatpush2.msra.mxu0 0.0
          %399 = vmatprep.subr.mxu0 0.0
          %400 = vmatpush2.msra.mxu0 0.0
          %401 = vmatprep.subr.mxu0 0.0
          %402 = vmatpush2.msra.mxu0 0.0
          %403 = vmatprep.subr.mxu0 0.0
          %404 = vmatpush2.msra.mxu0 0.0
          %405 = vmatprep.subr.mxu0 0.0
          %406 = vmatpush2.msra.mxu0 0.0
          %407 = vmatprep.subr.mxu0 0.0
          %408 = vmatpush2.msra.mxu0 0.0
          %409 = vmatprep.subr.mxu0 0.0
          %410 = vmatpush2.msra.mxu0 0.0
          %411 = vmatprep.subr.mxu0 0.0
          %412 = vmatpush2.msra.mxu0 0.0
          %413 = vmatprep.subr.mxu0 0.0
          %414 = vmatpush2.msra.mxu0 0.0
          %415 = vmatprep.subr.mxu0 0.0
          %416 = vmatpush2.msra.mxu0 0.0
          %417 = vmatprep.subr.mxu0 0.0
          %418 = vmatpush2.msra.mxu0 0.0
          %419 = vmatprep.subr.mxu0 0.0
          %420 = vmatpush2.msra.mxu0 0.0
          %421 = vmatprep.mubr.f32.mxu0 0.0
          %422 = vmatmul.mubr.f32.gmra.mxu0 %v350
          %v423 = vpop.f32.mrf.mxu0
          %v424 = vadd.f32 %v344, %v423
          %v425 = vpop.f32.mrf.mxu0
          %v426 = vadd.f32 %v344, %v425
          %427 = vdwg.mxu0
          %v428 = vld [vmem:[#allocation2] sm:$0x1]
          %vm429 = vcmask 1040384
          %v430 = vsel %vm429, %v424, -inf
          %v431 = vsel %vm429, %v426, -inf
          %v432 = vmax.f32 %v430, %v431
          %433 = vmax.xlane.f32.xlu0 %v432
          %v434 = vpop.xlane.xlu0 %433
          %v435 = vmax.f32 %v428, %v434
          %v436 = vsub.f32 %v428, %v435
          %v437 = vmul.f32 %v436, 1.442695
          %v438 = vpow.pop %v437
          %440 = vset.pattern.permute.xlu0 0
          %441 = vperm.xlu0 %440, %v435
          %v442 = vpop.permute.xlu0 %441
          %v444 = vlaneseq
          %v445 = vshrl.u32 %v444, 7
          %v446 = vsub.s32 0, %v445
          %v447 = vrot.slane %v442, %v446
          %v448 = vsub.f32 %v424, %v447
          %v449 = vsub.f32 %v426, %v447
          %v450 = vmul.f32 %v448, 1.442695
          %v451 = vpow.pop %v450
          %v452 = vmul.f32 %v449, 1.442695
          %v453 = vpow.pop %v452
          %v454 = vld [vmem:[#allocation3] sm:$0x1]
          %v455 = vmul.f32 %v454, %v438
          %v456 = vsel %vm429, %v451, 0.0
          %v457 = vsel %vm429, %v453, 0.0
          %v458 = vadd.f32 %v456, %v457
          %459 = vadd.xlane.f32.xlu0 %v458
          %v460 = vpop.xlane.xlu0 %459
          %v461 = vadd.f32 %v455, %v460
          %vm462 = vcmask 0
          %463 = vst.msk [vmem:[#allocation3] sm:$0x1] %vm462, %v461
          %v464 = vld [vmem:[#allocation4] sm:$0xf]
          %v466 = vlaneseq
          %v467 = vshrl.u32 %v466, 7
          %v468 = vsub.s32 0, %v467
          %v469 = vrot.slane %v438, %v468
          %v471 = vmul.f32 %v464, %v469
          %v472 = vlaneseq
          %v473 = vshrl.u32 %v472, 7
          %v474 = vsub.s32 0, %v473
          %v475 = vrot.slane %v451, %v474
          %v476 = vlaneseq
          %v477 = vshrl.u32 %v476, 7
          %v478 = vsub.s32 0, %v477
          %v479 = vrot.slane %v453, %v478
          %v482 = vcombine.low %v475, %v479
          %v484 = vmul.f32 %v325, %v482
          %v486 = vcombine.high %v484, %v484
          %v488 = vsel %vm352, %v484, 0.0
          %v489 = vsel %vm352, %v486, 0.0
          %v490 = vadd.f32 %v488, %v489
          %491 = vadd.xlane.f32.xlu0 %v490
          %v492 = vpop.xlane.xlu0 %491
          %v493 = vadd.f32 %v471, %v492
          %vm494 = vcmask 3072
          %495 = vst.msk [vmem:[#allocation4] sm:$0xf] %vm494, %v493
          %496 = vst.msk [vmem:[#allocation2] sm:$0x1] %vm462, %v435
          // Predicated region
          $region61: #{tpu_custom_call.1} parent=55 // pred_check
            %p497 = pneg %p330
          $region62: #{tpu_custom_call.1} parent=55 // pred_check_branch
            %499 = sbr.rel (%p497) target = $region64
          $region63: #{tpu_custom_call.1} parent=55 // pred_region
            %v500 = vld [vmem:[#allocation4] sm:$0xf]
            %v501 = vld [vmem:[#allocation3] sm:$0x1]
            %v502 = vrcp.pop %v501
            %v504 = vlaneseq
            %v505 = vshrl.u32 %v504, 7
            %v506 = vsub.s32 0, %v505
            %v507 = vrot.slane %v502, %v506
            %v509 = vmul.f32 %v500, %v507
            %v510 = vld [vmem:[%s3] sm:$0x3]
            %v511 = vld [vmem:[%s4] sm:$0x3]
            %v513 = vsel %vm348, %v510, 0
            %v516 = vsel %vm352, %v509, 0
            %518 = vmatprep.subr.mxu0 0.0
            %519 = vmatpush1.msra.mxu0 0.0
            %520 = vmatprep.subr.mxu0 0.0
            %521 = vmatpush1.msra.mxu0 0.0
            %522 = vmatprep.subr.mxu0 0.0
            %523 = vmatpush1.msra.mxu0 0.0
            %524 = vmatprep.subr.mxu0 0.0
            %525 = vmatpush1.msra.mxu0 0.0
            %526 = vmatprep.subr.mxu0 0.0
            %527 = vmatpush1.msra.mxu0 0.0
            %528 = vmatprep.subr.mxu0 0.0
            %529 = vmatpush1.msra.mxu0 0.0
            %530 = vmatprep.subr.mxu0 0.0
            %531 = vmatpush1.msra.mxu0 0.0
            %532 = vmatprep.subr.mxu0 0.0
            %533 = vmatpush1.msra.mxu0 0.0
            %534 = vmatprep.subr.mxu0 0.0
            %535 = vmatpush1.msra.mxu0 0.0
            %536 = vmatprep.subr.mxu0 0.0
            %537 = vmatpush1.msra.mxu0 0.0
            %538 = vmatprep.subr.mxu0 0.0
            %539 = vmatpush1.msra.mxu0 0.0
            %540 = vmatprep.subr.mxu0 0.0
            %541 = vmatpush1.msra.mxu0 0.0
            %542 = vmatprep.subr.mxu0 0.0
            %543 = vmatpush1.msra.mxu0 0.0
            %544 = vmatprep.subr.mxu0 0.0
            %545 = vmatpush1.msra.mxu0 0.0
            %546 = vmatprep.subr.mxu0 0.0
            %547 = vmatpush1.msra.mxu0 0.0
            %548 = vmatprep.subr.mxu0 0.0
            %549 = vmatpush1.msra.mxu0 %v516
            %550 = vmatprep.subr.mxu0 0.0
            %551 = vmatpush2.msra.mxu0 0.0
            %552 = vmatprep.subr.mxu0 0.0
            %553 = vmatpush2.msra.mxu0 0.0
            %554 = vmatprep.subr.mxu0 0.0
            %555 = vmatpush2.msra.mxu0 0.0
            %556 = vmatprep.subr.mxu0 0.0
            %557 = vmatpush2.msra.mxu0 0.0
            %558 = vmatprep.subr.mxu0 0.0
            %559 = vmatpush2.msra.mxu0 0.0
            %560 = vmatprep.subr.mxu0 0.0
            %561 = vmatpush2.msra.mxu0 0.0
            %562 = vmatprep.subr.mxu0 0.0
            %563 = vmatpush2.msra.mxu0 0.0
            %564 = vmatprep.subr.mxu0 0.0
            %565 = vmatpush2.msra.mxu0 0.0
            %566 = vmatprep.subr.mxu0 0.0
            %567 = vmatpush2.msra.mxu0 0.0
            %568 = vmatprep.subr.mxu0 0.0
            %569 = vmatpush2.msra.mxu0 0.0
            %570 = vmatprep.subr.mxu0 0.0
            %571 = vmatpush2.msra.mxu0 0.0
            %572 = vmatprep.subr.mxu0 0.0
            %573 = vmatpush2.msra.mxu0 0.0
            %574 = vmatprep.subr.mxu0 0.0
            %575 = vmatpush2.msra.mxu0 0.0
            %576 = vmatprep.subr.mxu0 0.0
            %577 = vmatpush2.msra.mxu0 0.0
            %578 = vmatprep.subr.mxu0 0.0
            %579 = vmatpush2.msra.mxu0 0.0
            %580 = vmatprep.subr.mxu0 0.0
            %581 = vmatpush2.msra.mxu0 0.0
            %582 = vmatprep.mubr.f32.mxu0 0.0
            %583 = vmatmul.mubr.f32.gmra.mxu0 %v513
            %v584 = vpop.f32.mrf.mxu0
            %v585 = vadd.f32 %v511, %v584
            %v586 = vpop.f32.mrf.mxu0
            %587 = vdwg.mxu0
            %vm588 = vcmask 1024
            %v589 = vsel %vm588, %v585, 0.0
            %v590 = vrot.slane %v589, 4
            %v591 = vadd.f32 %v589, %v590
            %v592 = vrot.slane %v591, 2
            %v593 = vadd.f32 %v591, %v592
            %v594 = vrot.slane %v593, 1
            %v595 = vadd.f32 %v593, %v594
            %v596 = vrcp.pop 2.0
            %v597 = vmul.f32 %v595, %v596
            %v598 = vsub.f32 %v585, %v597
            %v599 = vmul.f32 %v598, %v598
            %v600 = vsel %vm588, %v599, 0.0
            %v601 = vrot.slane %v600, 4
            %v602 = vadd.f32 %v600, %v601
            %v603 = vrot.slane %v602, 2
            %v604 = vadd.f32 %v602, %v603
            %v605 = vrot.slane %v604, 1
            %v606 = vadd.f32 %v604, %v605
            %v607 = vmul.f32 %v606, %v596
            %v608 = vadd.f32 %v607, 1e-05
            %v609 = vrsqrt.pop %v608
            %v610 = vmul.f32 %v598, %v609
            %612 = vrot.lane.b32.xlu0 %v511, 127
            %v613 = vpop.permute.xlu0 %612
            %v615 = vmul.f32 %v610, %v613
            %616 = vrot.lane.b32.xlu0 %v511, 126
            %v617 = vpop.permute.xlu0 %616
            %v619 = vadd.f32 %v615, %v617
            %v620 = vmax.f32 %v619, 0.0
            %v621 = vld [vmem:[%s5] sm:$0xf]
            %v622 = vld [vmem:[%s6] sm:$0xf]
            %vm623 = vcmask 15360
            %v625 = vsel %vm623, %v621, 0
            %vm627 = vcmask 1041408
            %v629 = vsel %vm627, %v620, 0
            %631 = vmatprep.subr.mxu0 0.0
            %632 = vmatpush1.msra.mxu0 0.0
            %633 = vmatprep.subr.mxu0 0.0
            %634 = vmatpush1.msra.mxu0 0.0
            %635 = vmatprep.subr.mxu0 0.0
            %636 = vmatpush1.msra.mxu0 0.0
            %637 = vmatprep.subr.mxu0 0.0
            %638 = vmatpush1.msra.mxu0 0.0
            %639 = vmatprep.subr.mxu0 0.0
            %640 = vmatpush1.msra.mxu0 0.0
            %641 = vmatprep.subr.mxu0 0.0
            %642 = vmatpush1.msra.mxu0 0.0
            %643 = vmatprep.subr.mxu0 0.0
            %644 = vmatpush1.msra.mxu0 0.0
            %645 = vmatprep.subr.mxu0 0.0
            %646 = vmatpush1.msra.mxu0 0.0
            %647 = vmatprep.subr.mxu0 0.0
            %648 = vmatpush1.msra.mxu0 0.0
            %649 = vmatprep.subr.mxu0 0.0
            %650 = vmatpush1.msra.mxu0 0.0
            %651 = vmatprep.subr.mxu0 0.0
            %652 = vmatpush1.msra.mxu0 0.0
            %653 = vmatprep.subr.mxu0 0.0
            %654 = vmatpush1.msra.mxu0 0.0
            %655 = vmatprep.subr.mxu0 0.0
            %656 = vmatpush1.msra.mxu0 0.0
            %657 = vmatprep.subr.mxu0 0.0
            %658 = vmatpush1.msra.mxu0 0.0
            %659 = vmatprep.subr.mxu0 0.0
            %660 = vmatpush1.msra.mxu0 0.0
            %661 = vmatprep.subr.mxu0 0.0
            %662 = vmatpush1.msra.mxu0 %v629
            %663 = vmatprep.subr.mxu0 0.0
            %664 = vmatpush2.msra.mxu0 0.0
            %665 = vmatprep.subr.mxu0 0.0
            %666 = vmatpush2.msra.mxu0 0.0
            %667 = vmatprep.subr.mxu0 0.0
            %668 = vmatpush2.msra.mxu0 0.0
            %669 = vmatprep.subr.mxu0 0.0
            %670 = vmatpush2.msra.mxu0 0.0
            %671 = vmatprep.subr.mxu0 0.0
            %672 = vmatpush2.msra.mxu0 0.0
            %673 = vmatprep.subr.mxu0 0.0
            %674 = vmatpush2.msra.mxu0 0.0
            %675 = vmatprep.subr.mxu0 0.0
            %676 = vmatpush2.msra.mxu0 0.0
            %677 = vmatprep.subr.mxu0 0.0
            %678 = vmatpush2.msra.mxu0 0.0
            %679 = vmatprep.subr.mxu0 0.0
            %680 = vmatpush2.msra.mxu0 0.0
            %681 = vmatprep.subr.mxu0 0.0
            %682 = vmatpush2.msra.mxu0 0.0
            %683 = vmatprep.subr.mxu0 0.0
            %684 = vmatpush2.msra.mxu0 0.0
            %685 = vmatprep.subr.mxu0 0.0
            %686 = vmatpush2.msra.mxu0 0.0
            %687 = vmatprep.subr.mxu0 0.0
            %688 = vmatpush2.msra.mxu0 0.0
            %689 = vmatprep.subr.mxu0 0.0
            %690 = vmatpush2.msra.mxu0 0.0
            %691 = vmatprep.subr.mxu0 0.0
            %692 = vmatpush2.msra.mxu0 0.0
            %693 = vmatprep.subr.mxu0 0.0
            %694 = vmatpush2.msra.mxu0 0.0
            %695 = vmatprep.mubr.f32.mxu0 0.0
            %696 = vmatmul.mubr.f32.gmra.mxu0 %v625
            %v697 = vpop.f32.mrf.mxu0
            %v698 = vadd.f32 %v622, %v697
            %v699 = vpop.f32.mrf.mxu0
            %700 = vdwg.mxu0
            %701 = vst.msk [vmem:[#allocation5] sm:$0xf] %vm494, %v698
          $region64: #{tpu_custom_call.1} parent=55 // pred_fallthru
            _
        $region56: #{tpu_custom_call.1} parent=47 // pred_fallthru
          _
        %p702 = scmp.eq.s32.totalorder %s30, 1
        // Predicated region
        $region65: #{tpu_custom_call.1} parent=47 // pred_check
          %p703 = pneg %p702
        $region66: #{tpu_custom_call.1} parent=47 // pred_check_branch
          %705 = sbr.rel (%p703) target = $region68
        $region67: #{tpu_custom_call.1} parent=47 // pred_region
          %v706 = vld [vmem:[%s1] sm:$0x1]
          %v707 = vld [vmem:[%s2] sm:$0x1]
          %709 = vset.pattern.permute.xlu0 0
          %710 = vperm.xlu0 %709, %v707
          %v711 = vpop.permute.xlu0 %710
          %v714 = vcombine.high %v325, %v325
          %vm715 = vcmask 31744
          %v717 = vsel %vm715, %v706, 0
          %vm719 = vcmask 1043456
          %v720 = vsel %vm719, %v325, 0
          %v722 = vsel %vm719, %v714, 0
          %724 = vmatprep.subr.mxu0 0.0
          %725 = vmatpush1.msra.mxu0 0.0
          %726 = vmatprep.subr.mxu0 0.0
          %727 = vmatpush1.msra.mxu0 0.0
          %728 = vmatprep.subr.mxu0 0.0
          %729 = vmatpush1.msra.mxu0 0.0
          %730 = vmatprep.subr.mxu0 0.0
          %731 = vmatpush1.msra.mxu0 0.0
          %732 = vmatprep.subr.mxu0 0.0
          %733 = vmatpush1.msra.mxu0 0.0
          %734 = vmatprep.subr.mxu0 0.0
          %735 = vmatpush1.msra.mxu0 0.0
          %736 = vmatprep.subr.mxu0 0.0
          %737 = vmatpush1.msra.mxu0 0.0
          %738 = vmatprep.subr.mxu0 0.0
          %739 = vmatpush1.msra.mxu0 0.0
          %740 = vmatprep.subr.mxu0 0.0
          %741 = vmatpush1.msra.mxu0 0.0
          %742 = vmatprep.subr.mxu0 0.0
          %743 = vmatpush1.msra.mxu0 0.0
          %744 = vmatprep.subr.mxu0 0.0
          %745 = vmatpush1.msra.mxu0 0.0
          %746 = vmatprep.subr.mxu0 0.0
          %747 = vmatpush1.msra.mxu0 0.0
          %748 = vmatprep.subr.mxu0 0.0
          %749 = vmatpush1.msra.mxu0 0.0
          %750 = vmatprep.subr.mxu0 0.0
          %751 = vmatpush1.msra.mxu0 0.0
          %752 = vmatprep.subr.mxu0 0.0
          %753 = vmatpush1.msra.mxu0 0.0
          %754 = vmatprep.subr.mxu0 %v722
          %755 = vmatpush1.msra.mxu0 %v720
          %756 = vmatprep.subr.mxu0 0.0
          %757 = vmatpush2.msra.mxu0 0.0
          %758 = vmatprep.subr.mxu0 0.0
          %759 = vmatpush2.msra.mxu0 0.0
          %760 = vmatprep.subr.mxu0 0.0
          %761 = vmatpush2.msra.mxu0 0.0
          %762 = vmatprep.subr.mxu0 0.0
          %763 = vmatpush2.msra.mxu0 0.0
          %764 = vmatprep.subr.mxu0 0.0
          %765 = vmatpush2.msra.mxu0 0.0
          %766 = vmatprep.subr.mxu0 0.0
          %767 = vmatpush2.msra.mxu0 0.0
          %768 = vmatprep.subr.mxu0 0.0
          %769 = vmatpush2.msra.mxu0 0.0
          %770 = vmatprep.subr.mxu0 0.0
          %771 = vmatpush2.msra.mxu0 0.0
          %772 = vmatprep.subr.mxu0 0.0
          %773 = vmatpush2.msra.mxu0 0.0
          %774 = vmatprep.subr.mxu0 0.0
          %775 = vmatpush2.msra.mxu0 0.0
          %776 = vmatprep.subr.mxu0 0.0
          %777 = vmatpush2.msra.mxu0 0.0
          %778 = vmatprep.subr.mxu0 0.0
          %779 = vmatpush2.msra.mxu0 0.0
          %780 = vmatprep.subr.mxu0 0.0
          %781 = vmatpush2.msra.mxu0 0.0
          %782 = vmatprep.subr.mxu0 0.0
          %783 = vmatpush2.msra.mxu0 0.0
          %784 = vmatprep.subr.mxu0 0.0
          %785 = vmatpush2.msra.mxu0 0.0
          %786 = vmatprep.subr.mxu0 0.0
          %787 = vmatpush2.msra.mxu0 0.0
          %788 = vmatprep.mubr.f32.mxu0 0.0
          %789 = vmatmul.mubr.f32.gmra.mxu0 %v717
          %v790 = vpop.f32.mrf.mxu0
          %v791 = vadd.f32 %v711, %v790
          %v792 = vpop.f32.mrf.mxu0
          %v793 = vadd.f32 %v711, %v792
          %794 = vdwg.mxu0
          %v795 = vxor.u32 %v791, 2147483648
          %v796 = vxor.u32 %v793, 2147483648
          %v797 = vmul.f32 %v795, 1.442695
          %v798 = vpow.pop %v797
          %v799 = vmul.f32 %v796, 1.442695
          %v800 = vpow.pop %v799
          %v801 = vadd.f32 %v798, 1.0
          %v802 = vadd.f32 %v800, 1.0
          %v803 = vrcp.pop %v801
          %v804 = vmul.f32 1.0, %v803
          %v805 = vrcp.pop %v802
          %v806 = vmul.f32 1.0, %v805
          %v807 = vld [vmem:[#allocation5] sm:$0xf]
          %809 = vset.pattern.permute.xlu0 0
          %810 = vperm.xlu0 %809, %v807
          %v811 = vpop.permute.xlu0 %810
          %v813 = vlaneseq
          %v814 = vshrl.u32 %v813, 7
          %v815 = vsub.s32 0, %v814
          %v816 = vrot.slane %v804, %v815
          %v817 = vlaneseq
          %v818 = vshrl.u32 %v817, 7
          %v819 = vsub.s32 0, %v818
          %v820 = vrot.slane %v806, %v819
          %v821 = vmul.f32 %v811, %v816
          %v822 = vmul.f32 %v811, %v820
          %v825 = vcombine.low %v821, %v822
          %v827 = vadd.f32 %v325, %v825
          %828 = vst [vmem:[%s321] sm:$0xff] %v827
        $region68: #{tpu_custom_call.1} parent=47 // pred_fallthru
          _
        %s829 = sand.u32 %s209, 1
        %s830 = scalar_lea.sflag [#allocation8], %s829
        %s831 = sand.u32 %s209, 1
        %s832 = smul.addr %s831, 8
        %s833 = scalar_lea.vmem [#allocation9], %s832
        // Predicated region
        $region69: #{tpu_custom_call.1} parent=47 // pred_check
          %p834 = pneg %p219
        $region70: #{tpu_custom_call.1} parent=47 // pred_check_branch
          %836 = sbr.rel (%p834) target = $region72
        $region71: #{tpu_custom_call.1} parent=47 // pred_region
          %s837 = smul.u32 %s31, %s30
          %s838 = smul.u32 2, %s837
          %s840 = ssub.s32 128, 128
          %841 = vsyncadd %s830, %s840
          %s842 = smul.addr %s29, 2
          %s843 = sadd.s32 %s838, %s842
          %s844 = smul.addr %s843, 64
          %s845 = scalar_lea.hbm %s7, %s844
          %s847 = sshll.u32 %s833, 4
          %s848 = int_to_ptr.vmem [resolvable:$true] %s847
          %850 = dma.vmem_to_hbm [thread:$0]  %s848, 128, %s845, %s830
        $region72: #{tpu_custom_call.1} parent=47 // pred_fallthru
          _
      $region48: #{tpu_custom_call.1} parent=5 // pred_fallthru
        _
      %p851 = scmp.le.s32.totalorder 2, %s19
      // Predicated region
      $region73: #{tpu_custom_call.1} parent=5 // pred_check
        %p852 = pneg %p851
      $region74: #{tpu_custom_call.1} parent=5 // pred_check_branch
        %854 = sbr.rel (%p852) target = $region76
      $region75: #{tpu_custom_call.1} parent=5 // pred_region
        %s855 = ssub.s32 %s19, 2
        // Predicated region
        $region77: #{tpu_custom_call.1} parent=75 // pred_check
          %p856 = pneg %p225
        $region78: #{tpu_custom_call.1} parent=75 // pred_check_branch
          %858 = sbr.rel (%p856) target = $region80
        $region79: #{tpu_custom_call.1} parent=75 // pred_region
          %s859 = sand.u32 %s210, 1
          %s860 = scalar_lea.sflag [#allocation8], %s859
          %s861 = sand.u32 %s210, 1
          %s862 = smul.addr %s861, 8
          %s863 = scalar_lea.vmem [#allocation9], %s862
          %864 = dma.done %s860, 128
        $region80: #{tpu_custom_call.1} parent=75 // pred_fallthru
          _
      $region76: #{tpu_custom_call.1} parent=5 // pred_fallthru
        _
    $region6: #{tpu_custom_call.1} parent=1 // loop_footer
      %s23 = sadd.s32 1, %s19
    $region7: #{tpu_custom_call.1} parent=1 // loop_footer_branch
      %18 = sbr.rel target = $region3
    $region8: #{tpu_custom_call.1} parent=1 // loop_exit
      _
    %865 = vsyncpa [#allocation7], 1
    %s866 = scalar_lea.sflag [#allocation7], 1
    %867 = vsyncpa %s866, 1
    %868 = vsyncpa [#allocation8], 1
    %s869 = scalar_lea.sflag [#allocation8], 1
    %870 = vsyncpa %s869, 1

</llo_original>
